<compile_context>
chip_gen: v7x
topology: tpu7x:2x2x1
jax: 0.10.0
libtpu: 0.0.40
codegen_flags: <defaults>
</compile_context>

<pallas_src>
import jax
import jax.numpy as jnp
from jax.experimental import pallas as pl
from jax.experimental.pallas import tpu as pltpu


def _round_up(v, m):
    return ((v + m - 1) // m) * m


def _make_ce_kernel(ignore_label, hw, tpix, tiles_per_super, mask_tail):
    def ce_kernel(logits_ref, target_ref, acc_ref):
        j = pl.program_id(2)  # pixel-tile index (reduction axis, resident acc)

        @pl.when(j == 0)
        def _():
            acc_ref[...] = jnp.zeros_like(acc_ref)

        x = logits_ref[...].astype(jnp.float32)        # (bt, c, tpix)
        t = target_ref[...].astype(jnp.int32)          # (bt, 1, tpix)
        bt, c, _ = x.shape

        valid = jnp.logical_and(t >= 0, t != ignore_label)      # (bt, 1, tpix)
        if mask_tail:
            # mask pixels past h*w (ragged last block and clamped duplicate
            # blocks) using the LOGICAL tile position, not the clamped one
            s = pl.program_id(1)
            blk = s * tiles_per_super + j
            lane = jax.lax.broadcasted_iota(jnp.int32, (1, 1, tpix), 2)
            valid = jnp.logical_and(valid, blk * tpix + lane < hw)

        # numerically stable log-sum-exp over the class (sublane) axis
        m = jnp.max(x, axis=1, keepdims=True)                    # (bt, 1, tpix)
        lse = m + jnp.log(jnp.sum(jnp.exp(x - m), axis=1, keepdims=True))

        # gather target-class logit via one-hot select + class-axis reduce
        ids = jax.lax.broadcasted_iota(jnp.int32, (1, c, tpix), 1)
        t_safe = jnp.where(valid, t, -1)               # -1 never matches a class
        picked = jnp.sum(jnp.where(ids == t_safe, x, 0.0),
                         axis=1, keepdims=True)                  # (bt, 1, tpix)

        per_px = jnp.where(valid, lse - picked, 0.0)             # (bt, 1, tpix)
        cnt_px = valid.astype(jnp.float32)                       # (bt, 1, tpix)

        # fused accumulator: sublane row 0 = loss, row 1 = count.
        row = jax.lax.broadcasted_iota(jnp.int32, (1, 2, 1), 1)
        acc_ref[...] += jnp.where(row == 0, per_px, cnt_px)      # (bt, 2, tpix)

    return ce_kernel


def cross_entropy_2d_ignore(predict, target, ignore_label=255, reduction="mean"):
    """predict: (n, c, h, w) float; target: (n, h, w) int. Returns scalar loss."""
    assert predict.ndim == 4 and target.ndim == 3
    n, c, h, w = predict.shape
    assert target.shape == (n, h, w)
    hw = h * w

    # Free reshapes only: keep producer dtype (bf16 halves HBM traffic).
    logits = predict.reshape(n, c, hw)
    tgt = target.reshape(n, 1, hw).astype(jnp.int32)

    itemsize = jnp.dtype(predict.dtype).itemsize

    # --- batch block: pack several images per step when c is tiny -----------
    bt = 1
    if c <= 8:
        for cand in (4, 2):
            if n % cand == 0 and n // cand >= 2:   # keep >=2 parallel batch blocks
                bt = cand
                break
    n_b = n // bt

    # --- VMEM budget (generation aware, padded footprint) -------------------
    try:
        vmem_cap = int(pltpu.get_tpu_info().vmem_capacity_bytes)
    except Exception:
        vmem_cap = 64 * 1024 * 1024          # conservative (v7x per-TC VMEM)
    vmem_budget = int(0.70 * vmem_cap)

    sub_mult = 8 if itemsize >= 4 else (16 if itemsize == 2 else 32)
    c_pad_in = _round_up(c, sub_mult)        # sublane padding of the logits tile
    c_pad_f32 = _round_up(c, 8)              # padding of in-kernel f32 temporaries
    K_TMP = 6                                # ~live (bt, c, tpix)-wide temporaries
    K_ROWS = 16                              # ~row-shaped tiles (tgt/acc bufs, m, lse, ...)
    per_pix = bt * (2 * c_pad_in * itemsize      # double-buffered logits tile
                    + K_TMP * c_pad_f32 * 4      # wide f32/i32 intermediates
                    + K_ROWS * 8 * 4)            # 8-sublane-padded row tiles
    tpix_vmem = max(128, (vmem_budget // per_pix // 128) * 128)

    # --- pixel tile: >= ~1 MiB of logits/step to amortize step overhead -----
    target_bytes = 1 * 1024 * 1024
    tpix = target_bytes // max(bt * c * itemsize, 1)
    tpix = min(tpix, 32768, tpix_vmem)
    tpix = max(128, (tpix // 128) * 128)
    if tpix >= hw:
        tpix = hw                            # single full-width tile (block == dim)
    else:
        # keep a few reduction steps per accumulator so input DMA stays overlapped
        if pl.cdiv(hw, tpix) < 4:
            cand = ((hw // 4) // 128) * 128
            if cand >= 2048:
                tpix = cand
    n_blocks = pl.cdiv(hw, tpix)

    # --- megacore: feed v7x's 2nd TensorCore when the batch axis is thin ----
    n_super = 2 if (n_b % 2 == 1 and n_blocks >= 2) else 1
    tps = pl.cdiv(n_blocks, n_super)
    mask_tail = (n_super * tps * tpix) > hw

    kernel = _make_ce_kernel(ignore_label, hw, tpix, tps, mask_tail)

    vmem_needed = per_pix * tpix
    vmem_limit = int(min(vmem_budget, max(32 * 1024 * 1024, 2 * vmem_needed)))

    def in_map(i, s, j):
        # clamp so duplicated trailing tiles (masked in-kernel) stay in bounds
        return (i, 0, jnp.minimum(s * tps + j, n_blocks - 1))

    parts = pl.pallas_call(
        kernel,
        out_shape=jax.ShapeDtypeStruct((n_b, n_super, bt, 2, tpix), jnp.float32),
        grid_spec=pltpu.PrefetchScalarGridSpec(
            num_scalar_prefetch=0,
            grid=(n_b, n_super, tps),
            in_specs=[
                pl.BlockSpec((bt, c, tpix), in_map),
                pl.BlockSpec((bt, 1, tpix), in_map),
            ],
            out_specs=pl.BlockSpec((None, None, bt, 2, tpix),
                                   lambda i, s, j: (i, s, 0, 0, 0)),
        ),
        compiler_params=pltpu.CompilerParams(
            dimension_semantics=("parallel", "parallel", "arbitrary"),
            vmem_limit_bytes=vmem_limit),
    )(logits, tgt)

    total = jnp.sum(parts[:, :, :, 0, :])
    cnt = jnp.sum(parts[:, :, :, 1, :])      # exact integer-valued f32 counts
    if reduction == "mean":
        return jnp.where(cnt > 0, total / jnp.maximum(cnt, 1.0), 0.0)
    elif reduction == "sum":
        return total
    else:
        raise NotImplementedError(reduction)


def _reference(predict, target, ignore_label=255):
    """pure-JAX reference mirroring the PyTorch module (reduction='mean')."""
    n, c, h, w = predict.shape
    logits = jnp.transpose(predict, (0, 2, 3, 1)).reshape(-1, c).astype(jnp.float32)
    t = target.reshape(-1).astype(jnp.int32)
    valid = (t >= 0) & (t != ignore_label)
    lse = jax.scipy.special.logsumexp(logits, axis=-1)
    picked = jnp.take_along_axis(
        logits, jnp.where(valid, t, 0)[:, None], axis=-1)[:, 0]
    per = jnp.where(valid, lse - picked, 0.0)
    cnt = jnp.sum(valid)
    return jnp.where(cnt > 0, jnp.sum(per) / jnp.maximum(cnt, 1), 0.0)


if __name__ == "__main__":
    # --- small case (toy shapes implied by the module) ----------------------
    k1, k2, k3 = jax.random.split(jax.random.PRNGKey(0), 3)
    n, c, h, w = 2, 4, 16, 16
    predict = jax.random.normal(k1, (n, c, h, w), dtype=jnp.float32)
    target = jax.random.randint(k2, (n, h, w), 0, c, dtype=jnp.int32)
    ignore_mask = jax.random.bernoulli(k3, 0.2, (n, h, w))
    target = jnp.where(ignore_mask, jnp.int32(255), target)

    loss = jax.block_until_ready(
        cross_entropy_2d_ignore(predict, target, ignore_label=255))
    ref = _reference(predict, target, ignore_label=255)
    assert jnp.allclose(loss, ref, atol=1e-5, rtol=1e-5), (loss, ref)

    # --- larger case: exercises multi-tile pixel axis, megacore super-block
    #     split, ragged-tail masking, and bf16 logits passthrough ------------
    k4, k5, k6 = jax.random.split(jax.random.PRNGKey(1), 3)
    n2, c2, h2, w2 = 1, 8, 190, 190
    predict2 = jax.random.normal(k4, (n2, c2, h2, w2), dtype=jnp.bfloat16)
    target2 = jax.random.randint(k5, (n2, h2, w2), 0, c2, dtype=jnp.int32)
    ignore_mask2 = jax.random.bernoulli(k6, 0.3, (n2, h2, w2))
    target2 = jnp.where(ignore_mask2, jnp.int32(255), target2)

    loss2 = jax.block_until_ready(
        cross_entropy_2d_ignore(predict2, target2, ignore_label=255))
    ref2 = _reference(predict2, target2, ignore_label=255)
    assert jnp.allclose(loss2, ref2, atol=1e-3, rtol=1e-3), (loss2, ref2)

    print("KERNEL_OK")
</pallas_src>

<mosaic_0001>
module attributes {stable_mosaic.version = 11 : i64} {
  func.func @ce_kernel(%arg0: i32, %arg1: i32, %arg2: i32, %arg3: memref<1x4x256xf32, #tpu.memory_space<vmem>>, %arg4: memref<1x1x256xi32, #tpu.memory_space<vmem>>, %arg5: memref<1x1x1x2x256xf32, #tpu.memory_space<vmem>>) attributes {dimension_semantics = [#tpu.dimension_semantics<parallel>, #tpu.dimension_semantics<parallel>, #tpu.dimension_semantics<arbitrary>], iteration_bounds = array<i64: 2, 1, 1>, scalar_prefetch = 0 : i64, scratch_operands = 0 : i64, tpu.core_type = #tpu.core_type<tc>, window_params = [{transform_indices = @transform_0, window_bounds = array<i64: 1, 4, 256>}, {transform_indices = @transform_1, window_bounds = array<i64: 1, 1, 256>}, {transform_indices = @transform_2, window_bounds = array<i64: 1, 1, 1, 2, 256>}]} {
    %c0_i32 = arith.constant 0 : i32
    %0 = arith.cmpi eq, %arg2, %c0_i32 : i32
    %1 = arith.extui %0 : i1 to i32
    %c0_i32_0 = arith.constant 0 : i32
    %2 = arith.cmpi ne, %1, %c0_i32_0 : i32
    scf.if %2 {
      %cst_22 = arith.constant 0.000000e+00 : f32
      %49 = vector.broadcast %cst_22 : f32 to vector<1x2x256xf32>
      %c0_23 = arith.constant 0 : index
      %c0_24 = arith.constant 0 : index
      %c0_25 = arith.constant 0 : index
      %c0_26 = arith.constant 0 : index
      %c0_27 = arith.constant 0 : index
      %50 = vector.load %arg5[%c0_23, %c0_24, %c0_25, %c0_26, %c0_27] : memref<1x1x1x2x256xf32, #tpu.memory_space<vmem>>, vector<1x1x1x2x256xf32>
      %51 = vector.shape_cast %50 : vector<1x1x1x2x256xf32> to vector<1x2x256xf32>
      %52 = vector.shape_cast %49 : vector<1x2x256xf32> to vector<1x1x1x2x256xf32>
      tpu.vector_store %arg5[%c0_23, %c0_24, %c0_25, %c0_26, %c0_27], %52 {strides = array<i32>} : memref<1x1x1x2x256xf32, #tpu.memory_space<vmem>>, vector<1x1x1x2x256xf32>,
    } else {
    }
    %c0 = arith.constant 0 : index
    %c0_1 = arith.constant 0 : index
    %c0_2 = arith.constant 0 : index
    %3 = vector.load %arg3[%c0, %c0_1, %c0_2] : memref<1x4x256xf32, #tpu.memory_space<vmem>>, vector<1x4x256xf32>
    %c0_3 = arith.constant 0 : index
    %c0_4 = arith.constant 0 : index
    %c0_5 = arith.constant 0 : index
    %4 = vector.load %arg4[%c0_3, %c0_4, %c0_5] : memref<1x1x256xi32, #tpu.memory_space<vmem>>, vector<1x1x256xi32>
    %c0_i32_6 = arith.constant 0 : i32
    %5 = vector.broadcast %c0_i32_6 : i32 to vector<1x1x256xi32>
    %6 = arith.cmpi sge, %4, %5 : vector<1x1x256xi32>
    %c255_i32 = arith.constant 255 : i32
    %7 = vector.broadcast %c255_i32 : i32 to vector<1x1x256xi32>
    %8 = arith.cmpi ne, %4, %7 : vector<1x1x256xi32>
    %9 = arith.andi %6, %8 : vector<1x1x256xi1>
    %cst = arith.constant dense<0xFF800000> : vector<1x256xf32>
    %10 = vector.multi_reduction <maximumf>, %3, %cst [1] : vector<1x4x256xf32> to vector<1x256xf32>
    %11 = vector.shape_cast %10 : vector<1x256xf32> to vector<1x1x256xf32>
    %12 = vector.broadcast %11 : vector<1x1x256xf32> to vector<1x4x256xf32>
    %13 = arith.subf %3, %12 : vector<1x4x256xf32>
    %14 = math.exp %13 : vector<1x4x256xf32>
    %cst_7 = arith.constant dense<0.000000e+00> : vector<1x256xf32>
    %15 = vector.multi_reduction <add>, %14, %cst_7 [1] : vector<1x4x256xf32> to vector<1x256xf32>
    %16 = vector.shape_cast %15 : vector<1x256xf32> to vector<1x1x256xf32>
    %17 = math.log %16 : vector<1x1x256xf32>
    %18 = arith.addf %11, %17 : vector<1x1x256xf32>
    %19 = tpu.iota {dimensions = array<i32: 1>} : vector<1x4x256xi32>
    %c-1_i32 = arith.constant -1 : i32
    %20 = vector.broadcast %c-1_i32 : i32 to vector<1x1x256xi32>
    %21 = arith.select %9, %4, %20 : vector<1x1x256xi1>, vector<1x1x256xi32>
    %22 = vector.broadcast %21 : vector<1x1x256xi32> to vector<1x4x256xi32>
    %23 = arith.cmpi eq, %19, %22 : vector<1x4x256xi32>
    %cst_8 = arith.constant 0.000000e+00 : f32
    %24 = vector.broadcast %cst_8 : f32 to vector<1x4x256xf32>
    %25 = arith.select %23, %3, %24 : vector<1x4x256xi1>, vector<1x4x256xf32>
    %cst_9 = arith.constant dense<0.000000e+00> : vector<1x256xf32>
    %26 = vector.multi_reduction <add>, %25, %cst_9 [1] : vector<1x4x256xf32> to vector<1x256xf32>
    %27 = vector.shape_cast %26 : vector<1x256xf32> to vector<1x1x256xf32>
    %28 = arith.subf %18, %27 : vector<1x1x256xf32>
    %cst_10 = arith.constant 0.000000e+00 : f32
    %29 = vector.broadcast %cst_10 : f32 to vector<1x1x256xf32>
    %30 = arith.select %9, %28, %29 : vector<1x1x256xi1>, vector<1x1x256xf32>
    %31 = arith.extui %9 : vector<1x1x256xi1> to vector<1x1x256xi32>
    %32 = arith.sitofp %31 : vector<1x1x256xi32> to vector<1x1x256xf32>
    %33 = tpu.iota {dimensions = array<i32: 1>} : vector<1x2x1xi32>
    %c0_11 = arith.constant 0 : index
    %c0_12 = arith.constant 0 : index
    %c0_13 = arith.constant 0 : index
    %c0_14 = arith.constant 0 : index
    %c0_15 = arith.constant 0 : index
    %34 = vector.load %arg5[%c0_11, %c0_12, %c0_13, %c0_14, %c0_15] : memref<1x1x1x2x256xf32, #tpu.memory_space<vmem>>, vector<1x1x1x2x256xf32>
    %35 = vector.shape_cast %34 : vector<1x1x1x2x256xf32> to vector<1x2x256xf32>
    %c0_i32_16 = arith.constant 0 : i32
    %36 = vector.broadcast %c0_i32_16 : i32 to vector<1x2x1xi32>
    %37 = arith.cmpi eq, %33, %36 : vector<1x2x1xi32>
    %38 = vector.shape_cast %37 : vector<1x2x1xi1> to vector<1x2x1xi1>
    %39 = vector.broadcast %38 : vector<1x2x1xi1> to vector<1x2x256xi1>
    %40 = vector.shape_cast %30 : vector<1x1x256xf32> to vector<1x1x256xf32>
    %41 = vector.broadcast %40 : vector<1x1x256xf32> to vector<1x2x256xf32>
    %42 = vector.shape_cast %32 : vector<1x1x256xf32> to vector<1x1x256xf32>
    %43 = vector.broadcast %42 : vector<1x1x256xf32> to vector<1x2x256xf32>
    %44 = arith.select %39, %41, %43 : vector<1x2x256xi1>, vector<1x2x256xf32>
    %45 = arith.addf %35, %44 : vector<1x2x256xf32>
    %c0_17 = arith.constant 0 : index
    %c0_18 = arith.constant 0 : index
    %c0_19 = arith.constant 0 : index
    %c0_20 = arith.constant 0 : index
    %c0_21 = arith.constant 0 : index
    %46 = vector.load %arg5[%c0_17, %c0_18, %c0_19, %c0_20, %c0_21] : memref<1x1x1x2x256xf32, #tpu.memory_space<vmem>>, vector<1x1x1x2x256xf32>
    %47 = vector.shape_cast %46 : vector<1x1x1x2x256xf32> to vector<1x2x256xf32>
    %48 = vector.shape_cast %45 : vector<1x2x256xf32> to vector<1x1x1x2x256xf32>
    tpu.vector_store %arg5[%c0_17, %c0_18, %c0_19, %c0_20, %c0_21], %48 {strides = array<i32>} : memref<1x1x1x2x256xf32, #tpu.memory_space<vmem>>, vector<1x1x1x2x256xf32>,
    return
  }
  func.func @transform_0(%arg0: i32, %arg1: i32, %arg2: i32) -> (i32, i32, i32) {
    %c1_i32 = arith.constant 1 : i32
    %0 = arith.muli %arg1, %c1_i32 : i32
    %1 = arith.addi %0, %arg2 : i32
    %c0_i32 = arith.constant 0 : i32
    %2 = arith.minsi %1, %c0_i32 : i32
    %c0_i32_0 = arith.constant 0 : i32
    %c0_i32_1 = arith.constant 0 : i32
    return %arg0, %c0_i32_0, %2 : i32, i32, i32
  }
  func.func @transform_1(%arg0: i32, %arg1: i32, %arg2: i32) -> (i32, i32, i32) {
    %c1_i32 = arith.constant 1 : i32
    %0 = arith.muli %arg1, %c1_i32 : i32
    %1 = arith.addi %0, %arg2 : i32
    %c0_i32 = arith.constant 0 : i32
    %2 = arith.minsi %1, %c0_i32 : i32
    %c0_i32_0 = arith.constant 0 : i32
    %c0_i32_1 = arith.constant 0 : i32
    return %arg0, %c0_i32_0, %2 : i32, i32, i32
  }
  func.func @transform_2(%arg0: i32, %arg1: i32, %arg2: i32) -> (i32, i32, i32, i32, i32) {
    %c0_i32 = arith.constant 0 : i32
    %c0_i32_0 = arith.constant 0 : i32
    %c0_i32_1 = arith.constant 0 : i32
    %c0_i32_2 = arith.constant 0 : i32
    return %arg0, %arg1, %c0_i32, %c0_i32_0, %c0_i32_1 : i32, i32, i32, i32, i32
  }
}

</mosaic_0001>

<llo_original>
// kernel: tpu_custom_call.1
$region0: #{tpu_custom_call.1}
  #allocation0 [shape = 'u32[]', space=smem, size = 0x4, offset = 0x4, fixed_abs, tag = 'smem constant byte address 0x4 - core index']
  #allocation1 [shape = 'u32[144,128]{1,0:T(1,128)}', space=vmem, size = 0x12000, scoped, tag = 'internal scratch']
  %s0 = inlined_call_operand.hbm [shape: f32[2,4,256], index: 0, kind: input, shape index: {}]
  %s1 = inlined_call_operand.hbm [shape: s32[2,1,256], index: 1, kind: input, shape index: {}]
  %s2 = inlined_call_operand.hbm [shape: f32[2,1,1,2,256], index: 2, kind: output, shape index: {}]
  %s3 = sld [smem:[#allocation0]]
  $region53: #{tpu_custom_call.1} parent=0
    _
  %s5 = ssub.s32 1, %s3
  %s6 = scalar_select 0, %s5, %s3
  $region1: #{tpu_custom_call.1} parent=0
    #allocation2 [shape = 'u8[8192]{0}', space=vmem, size = 0x2000, scoped, tag = 'input window, operand 0']
    #allocation3 [shape = 's32[2]{0}', space=sflag, size = 0x8, scoped, tag = 'scoped memory for tpu_custom_call.1']
    #allocation4 [shape = 's32[2]{0}', space=sflag, size = 0x8, scoped, tag = 'scoped memory for tpu_custom_call.1']
    #allocation5 [shape = 'u8[2048]{0}', space=vmem, size = 0x800, scoped, tag = 'input window, operand 1']
    #allocation6 [shape = 's32[2]{0}', space=sflag, size = 0x8, scoped, tag = 'scoped memory for tpu_custom_call.1']
    #allocation7 [shape = 'u8[4096]{0}', space=vmem, size = 0x1000, scoped, tag = 'output window, operand 0']
    %7 = vsyncpa [#allocation3], 0
    %s8 = scalar_lea.sflag [#allocation3], 1
    %9 = vsyncpa %s8, 0
    %10 = vsyncpa [#allocation6], 0
    %s11 = scalar_lea.sflag [#allocation6], 1
    %12 = vsyncpa %s11, 0
    %13 = vsyncpa [#allocation4], 0
    %s14 = scalar_lea.sflag [#allocation4], 1
    %15 = vsyncpa %s14, 0
    loop: start=0, step=1, limit=4
    $region2: #{tpu_custom_call.1} parent=1 // loop_pre_header
      _
    $region3: #{tpu_custom_call.1} parent=1 // loop_header
      %s17 = sphi 0, %s21
      %p18 = scmp.ge.s32.totalorder %s17, 4
      %s24 = sphi 0, %s43
      %s25 = sphi 0, %s39
      %s26 = sphi 0, %s35
      %s27 = sphi 0, %s24
      %s28 = sphi 0, %s25
      %s29 = sphi 0, %s26
      %s30 = sphi 0, %s27
      %s31 = sphi 0, %s28
      %s32 = sphi 0, %s29
      %s54 = sphi 0, %s56
      %s57 = sphi 0, %s54
      %s58 = sphi 0, %s57
      %s74 = sphi 0, %s58
      %s88 = sphi 0, %s90
      %s91 = sphi 0, %s88
      %s92 = sphi 0, %s91
      %s108 = sphi 0, %s92
      %s116 = sphi 0, %s118
      %s119 = sphi 0, %s116
      %s120 = sphi 0, %s119
      %s136 = sphi 0, %s120
    $region4: #{tpu_custom_call.1} parent=1 // loop_header_branch
      %20 = sbr.rel (%p18) target = $region8
    $region5: #{tpu_custom_call.1} parent=1 // loop_body
      %s22 = ssub.s32 %s17, 1
      %s23 = ssub.s32 %s17, 2
      %s33 = sadd.s32 1, %s26
      %p34 = scmp.ge.s32.totalorder %s33, 1
      %s35 = scalar_select %p34, 0, %s33
      %s36 = sadd.s32 1, %s25
      %s37 = scalar_select %p34, %s36, %s25
      %p38 = scmp.ge.s32.totalorder %s37, 1
      %s39 = scalar_select %p38, 0, %s37
      %s40 = sadd.s32 1, %s24
      %s41 = scalar_select %p38, %s40, %s24
      %p42 = scmp.ge.s32.totalorder %s41, 2
      %s43 = scalar_select %p42, 0, %s41
      %s44 = sadd.s32 %s25, %s26
      %p45 = scmp.lt.s32.totalorder %s44, 0
      %s46 = scalar_select %p45, %s44, 0
      %s47 = sadd.s32 %s39, %s35
      %p48 = scmp.lt.s32.totalorder %s47, 0
      %s49 = scalar_select %p48, %s47, 0
      %s50 = ssub.s32 %s24, %s43
      %s51 = ssub.s32 %s46, %s49
      %s52 = sor.u32 %s50, %s51
      %p53 = scmp.eq.s32.totalorder %s52, 0
      %s55 = sadd.s32 %s54, 1
      %s56 = scalar_select %p53, %s54, %s55
      %p59 = pneg %p53
      %p60 = scmp.eq.s32.totalorder %s17, 1
      %p61 = por %p59, %p60
      %p62 = scmp.ne.s32.totalorder %s54, %s57
      %p63 = scmp.eq.s32.totalorder %s17, 0
      %p64 = por %p62, %p63
      %p65 = scmp.ne.s32.totalorder %s54, %s57
      %p66 = scmp.eq.s32.totalorder %s22, 1
      %p67 = por %p65, %p66
      %p68 = scmp.ne.s32.totalorder %s57, %s58
      %p69 = scmp.eq.s32.totalorder %s22, 0
      %p70 = por %p68, %p69
      %p71 = scmp.ne.s32.totalorder %s57, %s58
      %p72 = scmp.eq.s32.totalorder %s23, 1
      %p73 = por %p71, %p72
      %p75 = scmp.ne.s32.totalorder %s58, %s74
      %p76 = scmp.eq.s32.totalorder %s23, 0
      %p77 = por %p75, %p76
      %s78 = sadd.s32 %s25, %s26
      %p79 = scmp.lt.s32.totalorder %s78, 0
      %s80 = scalar_select %p79, %s78, 0
      %s81 = sadd.s32 %s39, %s35
      %p82 = scmp.lt.s32.totalorder %s81, 0
      %s83 = scalar_select %p82, %s81, 0
      %s84 = ssub.s32 %s24, %s43
      %s85 = ssub.s32 %s80, %s83
      %s86 = sor.u32 %s84, %s85
      %p87 = scmp.eq.s32.totalorder %s86, 0
      %s89 = sadd.s32 %s88, 1
      %s90 = scalar_select %p87, %s88, %s89
      %p93 = pneg %p87
      %p94 = scmp.eq.s32.totalorder %s17, 1
      %p95 = por %p93, %p94
      %p96 = scmp.ne.s32.totalorder %s88, %s91
      %p97 = scmp.eq.s32.totalorder %s17, 0
      %p98 = por %p96, %p97
      %p99 = scmp.ne.s32.totalorder %s88, %s91
      %p100 = scmp.eq.s32.totalorder %s22, 1
      %p101 = por %p99, %p100
      %p102 = scmp.ne.s32.totalorder %s91, %s92
      %p103 = scmp.eq.s32.totalorder %s22, 0
      %p104 = por %p102, %p103
      %p105 = scmp.ne.s32.totalorder %s91, %s92
      %p106 = scmp.eq.s32.totalorder %s23, 1
      %p107 = por %p105, %p106
      %p109 = scmp.ne.s32.totalorder %s92, %s108
      %p110 = scmp.eq.s32.totalorder %s23, 0
      %p111 = por %p109, %p110
      %s112 = ssub.s32 %s24, %s43
      %s113 = ssub.s32 %s25, %s39
      %s114 = sor.u32 %s112, %s113
      %p115 = scmp.eq.s32.totalorder %s114, 0
      %s117 = sadd.s32 %s116, 1
      %s118 = scalar_select %p115, %s116, %s117
      %p121 = pneg %p115
      %p122 = scmp.eq.s32.totalorder %s17, 1
      %p123 = por %p121, %p122
      %p124 = scmp.ne.s32.totalorder %s116, %s119
      %p125 = scmp.eq.s32.totalorder %s17, 0
      %p126 = por %p124, %p125
      %p127 = scmp.ne.s32.totalorder %s116, %s119
      %p128 = scmp.eq.s32.totalorder %s22, 1
      %p129 = por %p127, %p128
      %p130 = scmp.ne.s32.totalorder %s119, %s120
      %p131 = scmp.eq.s32.totalorder %s22, 0
      %p132 = por %p130, %p131
      %p133 = scmp.ne.s32.totalorder %s119, %s120
      %p134 = scmp.eq.s32.totalorder %s23, 1
      %p135 = por %p133, %p134
      %p137 = scmp.ne.s32.totalorder %s120, %s136
      %p138 = scmp.eq.s32.totalorder %s23, 0
      %p139 = por %p137, %p138
      %p140 = scmp.le.s32.totalorder 1, %s17
      %p141 = scmp.lt.s32.totalorder %s17, 3
      %p142 = pnand %p140, %p141
      %p143 = pneg %p142
      // Predicated region
      $region9: #{tpu_custom_call.1} parent=5 // pred_check
        _
      $region10: #{tpu_custom_call.1} parent=5 // pred_check_branch
        %145 = sbr.rel (%p142) target = $region12
      $region11: #{tpu_custom_call.1} parent=5 // pred_region
        %s146 = ssub.s32 %s17, 1
      $region12: #{tpu_custom_call.1} parent=5 // pred_fallthru
        _
      %p147 = scmp.lt.s32.totalorder %s17, 2
      // Predicated region
      $region13: #{tpu_custom_call.1} parent=5 // pred_check
        %p148 = pneg %p147
      $region14: #{tpu_custom_call.1} parent=5 // pred_check_branch
        %150 = sbr.rel (%p148) target = $region16
      $region15: #{tpu_custom_call.1} parent=5 // pred_region
        // Predicated region
        $region17: #{tpu_custom_call.1} parent=15 // pred_check
          %p151 = pneg %p64
        $region18: #{tpu_custom_call.1} parent=15 // pred_check_branch
          %153 = sbr.rel (%p151) target = $region20
        $region19: #{tpu_custom_call.1} parent=15 // pred_region
          %s154 = sand.u32 %s54, 1
          %s155 = scalar_lea.sflag [#allocation3], %s154
          %s156 = sand.u32 %s54, 1
          %s157 = smul.addr %s156, 8
          %s158 = scalar_lea.vmem [#allocation2], %s157
          %s159 = sadd.s32 %s25, %s26
          %p160 = scmp.lt.s32.totalorder %s159, 0
          %s161 = scalar_select %p160, %s159, 0
          %s162 = smul.u32 2, %s161
          %s164 = ssub.s32 128, 128
          %165 = vsyncadd %s155, %s164
          %s166 = smul.addr %s24, 2
          %s167 = sadd.s32 %s162, %s166
          %s168 = smul.addr %s167, 64
          %s169 = scalar_lea.hbm %s0, %s168
          %s171 = sshll.u32 %s158, 4
          %s172 = int_to_ptr.vmem [resolvable:$true] %s171
          %174 = dma.hbm_to_vmem [thread:$0]  %s169, 128, %s172, %s155
        $region20: #{tpu_custom_call.1} parent=15 // pred_fallthru
          _
        // Predicated region
        $region21: #{tpu_custom_call.1} parent=15 // pred_check
          %p175 = pneg %p98
        $region22: #{tpu_custom_call.1} parent=15 // pred_check_branch
          %177 = sbr.rel (%p175) target = $region24
        $region23: #{tpu_custom_call.1} parent=15 // pred_region
          %s178 = sand.u32 %s88, 1
          %s179 = scalar_lea.sflag [#allocation6], %s178
          %s180 = sand.u32 %s88, 1
          %s181 = smul.addr %s180, 2
          %s182 = scalar_lea.vmem [#allocation5], %s181
          %s183 = sadd.s32 %s25, %s26
          %p184 = scmp.lt.s32.totalorder %s183, 0
          %s185 = scalar_select %p184, %s183, 0
          %s186 = smul.u32 2, %s185
          %s188 = ssub.s32 32, 32
          %189 = vsyncadd %s179, %s188
          %s190 = smul.addr %s24, 2
          %s191 = sadd.s32 %s186, %s190
          %s192 = smul.addr %s191, 16
          %s193 = scalar_lea.hbm %s1, %s192
          %s195 = sshll.u32 %s182, 4
          %s196 = int_to_ptr.vmem [resolvable:$true] %s195
          %198 = dma.hbm_to_vmem [thread:$0]  %s193, 32, %s196, %s179
        $region24: #{tpu_custom_call.1} parent=15 // pred_fallthru
          _
      $region16: #{tpu_custom_call.1} parent=5 // pred_fallthru
        _
      %p199 = scmp.le.s32.totalorder 1, %s17
      %p200 = scmp.lt.s32.totalorder %s17, 3
      %p201 = pnand %p199, %p200
      %p202 = pneg %p201
      // Predicated region
      $region25: #{tpu_custom_call.1} parent=5 // pred_check
        _
      $region26: #{tpu_custom_call.1} parent=5 // pred_check_branch
        %204 = sbr.rel (%p201) target = $region28
      $region27: #{tpu_custom_call.1} parent=5 // pred_region
        %s205 = ssub.s32 %s17, 1
        %s206 = sand.u32 %s57, 1
        %s207 = scalar_lea.sflag [#allocation3], %s206
        %s208 = sand.u32 %s57, 1
        %s209 = smul.addr %s208, 8
        %s210 = scalar_lea.vmem [#allocation2], %s209
        // Predicated region
        $region29: #{tpu_custom_call.1} parent=27 // pred_check
          %p211 = pneg %p70
        $region30: #{tpu_custom_call.1} parent=27 // pred_check_branch
          %213 = sbr.rel (%p211) target = $region32
        $region31: #{tpu_custom_call.1} parent=27 // pred_region
          %214 = dma.done %s207, 128
        $region32: #{tpu_custom_call.1} parent=27 // pred_fallthru
          _
        %s215 = sand.u32 %s91, 1
        %s216 = scalar_lea.sflag [#allocation6], %s215
        %s217 = sand.u32 %s91, 1
        %s218 = smul.addr %s217, 2
        %s219 = scalar_lea.vmem [#allocation5], %s218
        // Predicated region
        $region33: #{tpu_custom_call.1} parent=27 // pred_check
          %p220 = pneg %p104
        $region34: #{tpu_custom_call.1} parent=27 // pred_check_branch
          %222 = sbr.rel (%p220) target = $region36
        $region35: #{tpu_custom_call.1} parent=27 // pred_region
          %223 = dma.done %s216, 32
        $region36: #{tpu_custom_call.1} parent=27 // pred_fallthru
          _
        %s224 = sand.u32 %s57, 1
        %s225 = scalar_lea.sflag [#allocation3], %s224
        %s226 = sand.u32 %s57, 1
        %s227 = smul.addr %s226, 8
        %s228 = scalar_lea.vmem [#allocation2], %s227
        %p229 = pneg %p70
        %p230 = pneg %p67
        %s231 = sand.u32 %s91, 1
        %s232 = scalar_lea.sflag [#allocation6], %s231
        %s233 = sand.u32 %s91, 1
        %s234 = smul.addr %s233, 2
        %s235 = scalar_lea.vmem [#allocation5], %s234
        %p236 = pneg %p104
        %p237 = pneg %p101
        %p238 = pneg %p132
        %p239 = pneg %p129
        %s240 = sand.u32 %s119, 1
        %s241 = scalar_lea.sflag [#allocation4], %s240
        %s242 = sand.u32 %s119, 1
        %s243 = smul.addr %s242, 4
        %s244 = scalar_lea.vmem [#allocation7], %s243
        %s245 = sadd.s32 %s28, %s29
        %p246 = scmp.lt.s32.totalorder %s245, 0
        %s247 = scalar_select %p246, %s245, 0
        %s248 = smul.u32 2, %s247
        %s249 = sadd.s32 %s28, %s29
        %p250 = scmp.lt.s32.totalorder %s249, 0
        %s251 = scalar_select %p250, %s249, 0
        %s252 = smul.u32 2, %s251
        %p253 = scmp.eq.s32.totalorder %s29, 0
        // Predicated region
        $region37: #{tpu_custom_call.1} parent=27 // pred_check
          %p254 = pneg %p253
        $region38: #{tpu_custom_call.1} parent=27 // pred_check_branch
          %256 = sbr.rel (%p254) target = $region40
        $region39: #{tpu_custom_call.1} parent=27 // pred_region
          %257 = vst [vmem:[%s244] sm:$0xf] 0.0
        $region40: #{tpu_custom_call.1} parent=27 // pred_fallthru
          _
        %v258 = vld [vmem:[%s210] sm:$0xff]
        %v259 = vld [vmem:[%s219] sm:$0x3]
        %vm260 = vcmp.ge.s32.totalorder %v259, 0
        %vm261 = vcmp.ne.s32.totalorder %v259, 255
        %vm262 = vmand %vm260, %vm261
        %v264 = vcombine.high %v258, %v258
        %vm266 = vcmask 1043456
        %v267 = vsel %vm266, %v258, -inf
        %v268 = vrot.slane %v267, 4
        %v269 = vmax.f32 %v267, %v268
        %v270 = vrot.slane %v269, 2
        %v271 = vmax.f32 %v269, %v270
        %v272 = vrot.slane %v271, 1
        %v273 = vmax.f32 %v271, %v272
        %v274 = vsel %vm266, %v264, -inf
        %v275 = vrot.slane %v274, 4
        %v276 = vmax.f32 %v274, %v275
        %v277 = vrot.slane %v276, 2
        %v278 = vmax.f32 %v276, %v277
        %v279 = vrot.slane %v278, 1
        %v280 = vmax.f32 %v278, %v279
        %v283 = vcombine.low %v273, %v280
        %v285 = vsub.f32 %v258, %v283
        %v286 = vmul.f32 %v285, 1.442695
        %v287 = vpow.pop %v286
        %v289 = vcombine.high %v287, %v287
        %v291 = vsel %vm266, %v287, 0.0
        %v292 = vrot.slane %v291, 4
        %v293 = vadd.f32 %v291, %v292
        %v294 = vrot.slane %v293, 2
        %v295 = vadd.f32 %v293, %v294
        %v296 = vrot.slane %v295, 1
        %v297 = vadd.f32 %v295, %v296
        %v298 = vsel %vm266, %v289, 0.0
        %v299 = vrot.slane %v298, 4
        %v300 = vadd.f32 %v298, %v299
        %v301 = vrot.slane %v300, 2
        %v302 = vadd.f32 %v300, %v301
        %v303 = vrot.slane %v302, 1
        %v304 = vadd.f32 %v302, %v303
        %v305 = vlog2.pop %v297
        %v306 = vmul.f32 %v305, 0.6931472
        %v307 = vlog2.pop %v304
        %v308 = vmul.f32 %v307, 0.6931472
        %v309 = vadd.f32 %v273, %v306
        %v310 = vadd.f32 %v280, %v308
        %v311 = vlaneseq
        %v312 = vshrl.u32 %v311, 7
        %v313 = vsel %vm262, %v259, 4294967295
        %v314 = vlaneseq
        %v315 = vshrl.u32 %v314, 7
        %v316 = vsub.s32 0, %v315
        %v317 = vrot.slane %v313, %v316
        %v318 = vlaneseq
        %v319 = vshrl.u32 %v318, 7
        %v320 = vsub.s32 1, %v319
        %v321 = vrot.slane %v313, %v320
        %vm322 = vcmp.eq.s32.totalorder %v312, %v317
        %vm323 = vcmp.eq.s32.totalorder %v312, %v321
        %v324 = vsel %vm322, %v258, 0.0
        %v325 = vsel %vm323, %v264, 0.0
        %v326 = vsel %vm266, %v324, 0.0
        %v327 = vrot.slane %v326, 4
        %v328 = vadd.f32 %v326, %v327
        %v329 = vrot.slane %v328, 2
        %v330 = vadd.f32 %v328, %v329
        %v331 = vrot.slane %v330, 1
        %v332 = vadd.f32 %v330, %v331
        %v333 = vsel %vm266, %v325, 0.0
        %v334 = vrot.slane %v333, 4
        %v335 = vadd.f32 %v333, %v334
        %v336 = vrot.slane %v335, 2
        %v337 = vadd.f32 %v335, %v336
        %v338 = vrot.slane %v337, 1
        %v339 = vadd.f32 %v337, %v338
        %v340 = vsub.f32 %v309, %v332
        %v341 = vsub.f32 %v310, %v339
        %v344 = vcombine.low %v340, %v341
        %v346 = vunpack.c.l.s4 1966171168
        %v347 = vunpack.c.0.s8 %v346
        %v348 = vlaneseq
        %v349 = vshrl.u32 %v348, 7
        %v350 = vsub.s32 %v347, %v349
        %v351 = vrot.slane %v344, %v350
        %v353 = vunpack.c.l.s4 1966171168
        %v354 = vunpack.c.0.s8 %v353
        %v355 = vlaneseq
        %v356 = vshrl.u32 %v355, 7
        %v357 = vsub.s32 %v354, %v356
        %v358 = vrot.slane %v351, %v357
        %v360 = vsel %vm262, %v358, 0.0
        %v361 = vsel %vm262, 1, 0
        %v362 = vcvt.s32.f32 %v361
        %v363 = vld [vmem:[%s244] sm:$0xf]
        %vm364 = vcmp.eq.s32.totalorder %v312, 0
        %v365 = vsel %vm364, 1, 0
        %vm366 = vcmp.eq.s32.totalorder %v365, 1
        %v368 = vlaneseq
        %v369 = vshrl.u32 %v368, 7
        %v370 = vsub.s32 0, %v369
        %v371 = vrot.slane %v360, %v370
        %v372 = vlaneseq
        %v373 = vshrl.u32 %v372, 7
        %v374 = vsub.s32 1, %v373
        %v375 = vrot.slane %v360, %v374
        %v379 = vlaneseq
        %v380 = vshrl.u32 %v379, 7
        %v381 = vsub.s32 0, %v380
        %v382 = vrot.slane %v362, %v381
        %v383 = vlaneseq
        %v384 = vshrl.u32 %v383, 7
        %v385 = vsub.s32 1, %v384
        %v386 = vrot.slane %v362, %v385
        %v389 = vsel %vm366, %v371, %v382
        %v390 = vsel %vm366, %v375, %v386
        %v393 = vcombine.low %v389, %v390
        %v395 = vunpack.c.l.s4 1983009808
        %v396 = vunpack.c.0.s8 %v395
        %v397 = vlaneseq
        %v398 = vshrl.u32 %v397, 7
        %v399 = vsub.s32 %v396, %v398
        %v400 = vrot.slane %v393, %v399
        %v402 = vadd.f32 %v363, %v400
        %403 = vst [vmem:[%s244] sm:$0xf] %v402
        %s404 = sand.u32 %s119, 1
        %s405 = scalar_lea.sflag [#allocation4], %s404
        %s406 = sand.u32 %s119, 1
        %s407 = smul.addr %s406, 4
        %s408 = scalar_lea.vmem [#allocation7], %s407
        // Predicated region
        $region41: #{tpu_custom_call.1} parent=27 // pred_check
          %p409 = pneg %p129
        $region42: #{tpu_custom_call.1} parent=27 // pred_check_branch
          %411 = sbr.rel (%p409) target = $region44
        $region43: #{tpu_custom_call.1} parent=27 // pred_region
          %s413 = ssub.s32 64, 64
          %414 = vsyncadd %s405, %s413
          %s415 = smul.addr %s28, 2
          %s416 = smul.addr %s27, 2
          %s417 = sadd.s32 %s415, %s416
          %s418 = smul.addr %s417, 32
          %s419 = scalar_lea.hbm %s2, %s418
          %s421 = sshll.u32 %s408, 4
          %s422 = int_to_ptr.vmem [resolvable:$true] %s421
          %424 = dma.vmem_to_hbm [thread:$0]  %s422, 64, %s419, %s405
        $region44: #{tpu_custom_call.1} parent=27 // pred_fallthru
          _
      $region28: #{tpu_custom_call.1} parent=5 // pred_fallthru
        _
      %p425 = scmp.le.s32.totalorder 2, %s17
      // Predicated region
      $region45: #{tpu_custom_call.1} parent=5 // pred_check
        %p426 = pneg %p425
      $region46: #{tpu_custom_call.1} parent=5 // pred_check_branch
        %428 = sbr.rel (%p426) target = $region48
      $region47: #{tpu_custom_call.1} parent=5 // pred_region
        %s429 = ssub.s32 %s17, 2
        // Predicated region
        $region49: #{tpu_custom_call.1} parent=47 // pred_check
          %p430 = pneg %p135
        $region50: #{tpu_custom_call.1} parent=47 // pred_check_branch
          %432 = sbr.rel (%p430) target = $region52
        $region51: #{tpu_custom_call.1} parent=47 // pred_region
          %s433 = sand.u32 %s120, 1
          %s434 = scalar_lea.sflag [#allocation4], %s433
          %s435 = sand.u32 %s120, 1
          %s436 = smul.addr %s435, 4
          %s437 = scalar_lea.vmem [#allocation7], %s436
          %438 = dma.done %s434, 64
        $region52: #{tpu_custom_call.1} parent=47 // pred_fallthru
          _
      $region48: #{tpu_custom_call.1} parent=5 // pred_fallthru
        _
    $region6: #{tpu_custom_call.1} parent=1 // loop_footer
      %s21 = sadd.s32 1, %s17
    $region7: #{tpu_custom_call.1} parent=1 // loop_footer_branch
      %16 = sbr.rel target = $region3
    $region8: #{tpu_custom_call.1} parent=1 // loop_exit
      _
    %439 = vsyncpa [#allocation3], 1
    %s440 = scalar_lea.sflag [#allocation3], 1
    %441 = vsyncpa %s440, 1
    %442 = vsyncpa [#allocation6], 1
    %s443 = scalar_lea.sflag [#allocation6], 1
    %444 = vsyncpa %s443, 1
    %445 = vsyncpa [#allocation4], 1
    %s446 = scalar_lea.sflag [#allocation4], 1
    %447 = vsyncpa %s446, 1

</llo_original>
